<compile_context>
chip_gen: v5e
topology: v5e:2x2
jax: 0.10.0
libtpu: 0.0.40
codegen_flags: <defaults>
</compile_context>

<pallas_src>
import jax
import jax.numpy as jnp
from jax.experimental import pallas as pl
from jax.experimental.pallas import tpu as pltpu


def _make_kernel(H, W, C):
    WC = W * C
    WCP = (W + 2) * C  # padded (flattened) width

    def kernel(x_ref, w_ref, b_ref, o_ref, xp_ref):
        # x_ref:  (1, H, W*C)     input tile (lane-dense last dim)
        # w_ref:  (9, W*C)        depthwise 3x3 taps, BN scale folded in, tiled over W
        # b_ref:  (1, W*C)        fused BN bias, tiled over W
        # o_ref:  (1, H, W*C)     output tile
        # xp_ref: (H+2, (W+2)*C)  VMEM scratch: tile with zero halo (storage dtype)
        dt = xp_ref.dtype

        # Zero only the halo strips (cheap VMEM stores), then copy the interior.
        xp_ref[0:1, :] = jnp.zeros((1, WCP), dt)
        xp_ref[H + 1:H + 2, :] = jnp.zeros((1, WCP), dt)
        xp_ref[:, 0:C] = jnp.zeros((H + 2, C), dt)
        xp_ref[:, C + WC:C + WC + C] = jnp.zeros((H + 2, C), dt)
        xp_ref[1:1 + H, C:C + WC] = x_ref[0]

        # Depthwise 3x3 conv as 9 shifted multiply-accumulates.
        # Each tap is a ref slice (only acc + one tap live); f32 accumulation.
        acc = jnp.zeros((H, WC), jnp.float32)
        for ki in range(3):
            for kj in range(3):
                tap = xp_ref[ki:ki + H, kj * C:kj * C + WC].astype(jnp.float32)
                acc = acc + tap * w_ref[ki * 3 + kj, :].astype(jnp.float32)

        # Residual add + fused BN bias (scale already folded into the taps).
        out = x_ref[0].astype(jnp.float32) + acc + b_ref[0].astype(jnp.float32)
        o_ref[0, :, :] = out.astype(o_ref.dtype)

    return kernel


def residual_dwconv_bn(x_nchw, w_dw, gamma, beta, running_mean, running_var,
                       eps=1e-5):
    """x_nchw: (N, C, H, W); w_dw: (C, 1, 3, 3) depthwise conv weight (groups=C)."""
    N, C, H, W = x_nchw.shape
    WC = W * C

    # ---- glue: layout + parameter folding (plain JAX) ----
    # TODO(synk): NCHW<->NHWC transposes could be dropped entirely if the
    # surrounding graph were kept channels-last.
    x = jnp.transpose(x_nchw, (0, 2, 3, 1)).reshape(N, H, WC)   # (N, H, W*C)

    inv_std = gamma / jnp.sqrt(running_var + eps)
    # Fold BN scale into the depthwise taps: (C,3,3) -> (3,3,C) -> (9,C) -> (9,W*C)
    w = jnp.transpose(w_dw[:, 0, :, :] * inv_std[:, None, None], (1, 2, 0))
    w_flat = jnp.tile(w.reshape(9, C), (1, W))                  # (9, W*C)
    bias = beta - running_mean * inv_std                        # (C,)
    bias_flat = jnp.tile(bias, W).reshape(1, WC)                # (1, W*C)

    kernel = _make_kernel(H, W, C)

    out = pl.pallas_call(
        kernel,
        out_shape=jax.ShapeDtypeStruct((N, H, WC), x.dtype),
        grid_spec=pltpu.PrefetchScalarGridSpec(
            num_scalar_prefetch=0,
            grid=(N,),
            in_specs=[
                pl.BlockSpec((1, H, WC), lambda n: (n, 0, 0)),
                pl.BlockSpec((9, WC), lambda n: (0, 0)),
                pl.BlockSpec((1, WC), lambda n: (0, 0)),
            ],
            out_specs=pl.BlockSpec((1, H, WC), lambda n: (n, 0, 0)),
            scratch_shapes=[pltpu.VMEM((H + 2, (W + 2) * C), x.dtype)],
        ),
        compiler_params=pltpu.CompilerParams(
            dimension_semantics=("parallel",)),
    )(x, w_flat, bias_flat)

    # TODO(synk): for large H*W*C add an H-tile grid axis (halo rows via manual
    # DMA) to bound per-block VMEM on v7x (64 MiB) and deepen the DMA pipeline.
    return jnp.transpose(out.reshape(N, H, W, C), (0, 3, 1, 2))  # back to NCHW


def _reference(x_nchw, w_dw, gamma, beta, running_mean, running_var, eps=1e-5):
    """Pure-JAX reference of x + BN(DWConv3x3(x)) in NCHW (eval mode)."""
    N, C, H, W = x_nchw.shape
    conv = jax.lax.conv_general_dilated(
        x_nchw.astype(jnp.float32), w_dw.astype(jnp.float32),
        window_strides=(1, 1), padding=((1, 1), (1, 1)),
        feature_group_count=C,
        dimension_numbers=("NCHW", "OIHW", "NCHW"))
    scale = (gamma / jnp.sqrt(running_var + eps)).reshape(1, C, 1, 1)
    bias = (beta - running_mean * gamma / jnp.sqrt(running_var + eps)).reshape(1, C, 1, 1)
    return x_nchw + conv * scale + bias


if __name__ == "__main__":
    key = jax.random.PRNGKey(0)
    N, C, H, W = 2, 4, 16, 16

    k_x, k_w, k_m, k_v = jax.random.split(key, 4)
    x = jax.random.normal(k_x, (N, C, H, W), jnp.float32)
    # Depthwise conv weight: (C, 1, 3, 3), groups = C = in_channels.
    w_dw = jax.random.normal(k_w, (C, 1, 3, 3), jnp.float32) * 0.1
    # Conv2d_BN init: bn.weight = 1, bn.bias = 0; deterministic running stats.
    gamma = jnp.ones((C,), jnp.float32)
    beta = jnp.zeros((C,), jnp.float32)
    running_mean = jax.random.normal(k_m, (C,), jnp.float32) * 0.1
    running_var = jax.random.uniform(k_v, (C,), jnp.float32, 0.5, 1.5)

    out = residual_dwconv_bn(x, w_dw, gamma, beta, running_mean, running_var)
    out = jax.block_until_ready(out)

    ref = _reference(x, w_dw, gamma, beta, running_mean, running_var)
    assert out.shape == (N, C, H, W)
    assert jnp.allclose(out, ref, atol=1e-5, rtol=1e-5), "mismatch vs reference"
    # TODO(synk): training-mode stochastic depth (drop > 0) not implemented; eval path only.
    print("KERNEL_OK")
</pallas_src>

<mosaic_0001>
module attributes {stable_mosaic.version = 11 : i64} {
  func.func @kernel(%arg0: i32, %arg1: memref<1x16x64xf32, #tpu.memory_space<vmem>>, %arg2: memref<9x64xf32, #tpu.memory_space<vmem>>, %arg3: memref<1x64xf32, #tpu.memory_space<vmem>>, %arg4: memref<1x16x64xf32, #tpu.memory_space<vmem>>, %arg5: memref<18x72xf32, #tpu.memory_space<vmem>>) attributes {dimension_semantics = [#tpu.dimension_semantics<parallel>], iteration_bounds = array<i64: 2>, scalar_prefetch = 0 : i64, scratch_operands = 1 : i64, tpu.core_type = #tpu.core_type<tc>, window_params = [{transform_indices = @transform_0, window_bounds = array<i64: 1, 16, 64>}, {pipeline_mode = #tpu.pipeline_mode<synchronous>, transform_indices = @transform_1, window_bounds = array<i64: 9, 64>}, {pipeline_mode = #tpu.pipeline_mode<synchronous>, transform_indices = @transform_2, window_bounds = array<i64: 1, 64>}, {transform_indices = @transform_3, window_bounds = array<i64: 1, 16, 64>}]} {
    %cst = arith.constant 0.000000e+00 : f32
    %0 = vector.broadcast %cst : f32 to vector<1x72xf32>
    %c0 = arith.constant 0 : index
    %c0_0 = arith.constant 0 : index
    %1 = vector.load %arg5[%c0, %c0_0] : memref<18x72xf32, #tpu.memory_space<vmem>>, vector<1x72xf32>
    tpu.vector_store %arg5[%c0, %c0_0], %0 {strides = array<i32>} : memref<18x72xf32, #tpu.memory_space<vmem>>, vector<1x72xf32>,
    %cst_1 = arith.constant 0.000000e+00 : f32
    %2 = vector.broadcast %cst_1 : f32 to vector<1x72xf32>
    %c17 = arith.constant 17 : index
    %c0_2 = arith.constant 0 : index
    %3 = vector.load %arg5[%c17, %c0_2] : memref<18x72xf32, #tpu.memory_space<vmem>>, vector<1x72xf32>
    tpu.vector_store %arg5[%c17, %c0_2], %2 {strides = array<i32>} : memref<18x72xf32, #tpu.memory_space<vmem>>, vector<1x72xf32>,
    %cst_3 = arith.constant 0.000000e+00 : f32
    %4 = vector.broadcast %cst_3 : f32 to vector<18x4xf32>
    %c0_4 = arith.constant 0 : index
    %c0_5 = arith.constant 0 : index
    %5 = vector.load %arg5[%c0_4, %c0_5] : memref<18x72xf32, #tpu.memory_space<vmem>>, vector<18x4xf32>
    tpu.vector_store %arg5[%c0_4, %c0_5], %4 {strides = array<i32>} : memref<18x72xf32, #tpu.memory_space<vmem>>, vector<18x4xf32>,
    %cst_6 = arith.constant 0.000000e+00 : f32
    %6 = vector.broadcast %cst_6 : f32 to vector<18x4xf32>
    %c0_7 = arith.constant 0 : index
    %c68 = arith.constant 68 : index
    %7 = vector.load %arg5[%c0_7, %c68] : memref<18x72xf32, #tpu.memory_space<vmem>>, vector<18x4xf32>
    tpu.vector_store %arg5[%c0_7, %c68], %6 {strides = array<i32>} : memref<18x72xf32, #tpu.memory_space<vmem>>, vector<18x4xf32>,
    %c0_8 = arith.constant 0 : index
    %c0_9 = arith.constant 0 : index
    %c0_10 = arith.constant 0 : index
    %8 = vector.load %arg1[%c0_8, %c0_9, %c0_10] : memref<1x16x64xf32, #tpu.memory_space<vmem>>, vector<1x16x64xf32>
    %9 = vector.shape_cast %8 : vector<1x16x64xf32> to vector<16x64xf32>
    %c1 = arith.constant 1 : index
    %c4 = arith.constant 4 : index
    %10 = vector.load %arg5[%c1, %c4] : memref<18x72xf32, #tpu.memory_space<vmem>>, vector<16x64xf32>
    tpu.vector_store %arg5[%c1, %c4], %9 {strides = array<i32>} : memref<18x72xf32, #tpu.memory_space<vmem>>, vector<16x64xf32>,
    %cst_11 = arith.constant 0.000000e+00 : f32
    %11 = vector.broadcast %cst_11 : f32 to vector<16x64xf32>
    %c0_12 = arith.constant 0 : index
    %c0_13 = arith.constant 0 : index
    %12 = vector.load %arg5[%c0_12, %c0_13] : memref<18x72xf32, #tpu.memory_space<vmem>>, vector<16x64xf32>
    %c0_14 = arith.constant 0 : index
    %c0_15 = arith.constant 0 : index
    %13 = vector.load %arg2[%c0_14, %c0_15] : memref<9x64xf32, #tpu.memory_space<vmem>>, vector<1x64xf32>
    %14 = vector.shape_cast %13 : vector<1x64xf32> to vector<64xf32>
    %15 = vector.shape_cast %14 : vector<64xf32> to vector<1x64xf32>
    %16 = vector.broadcast %15 : vector<1x64xf32> to vector<16x64xf32>
    %17 = arith.mulf %12, %16 : vector<16x64xf32>
    %18 = arith.addf %11, %17 : vector<16x64xf32>
    %c0_16 = arith.constant 0 : index
    %c4_17 = arith.constant 4 : index
    %19 = vector.load %arg5[%c0_16, %c4_17] : memref<18x72xf32, #tpu.memory_space<vmem>>, vector<16x64xf32>
    %c1_18 = arith.constant 1 : index
    %c0_19 = arith.constant 0 : index
    %20 = vector.load %arg2[%c1_18, %c0_19] : memref<9x64xf32, #tpu.memory_space<vmem>>, vector<1x64xf32>
    %21 = vector.shape_cast %20 : vector<1x64xf32> to vector<64xf32>
    %22 = vector.shape_cast %21 : vector<64xf32> to vector<1x64xf32>
    %23 = vector.broadcast %22 : vector<1x64xf32> to vector<16x64xf32>
    %24 = arith.mulf %19, %23 : vector<16x64xf32>
    %25 = arith.addf %18, %24 : vector<16x64xf32>
    %c0_20 = arith.constant 0 : index
    %c8 = arith.constant 8 : index
    %26 = vector.load %arg5[%c0_20, %c8] : memref<18x72xf32, #tpu.memory_space<vmem>>, vector<16x64xf32>
    %c2 = arith.constant 2 : index
    %c0_21 = arith.constant 0 : index
    %27 = vector.load %arg2[%c2, %c0_21] : memref<9x64xf32, #tpu.memory_space<vmem>>, vector<1x64xf32>
    %28 = vector.shape_cast %27 : vector<1x64xf32> to vector<64xf32>
    %29 = vector.shape_cast %28 : vector<64xf32> to vector<1x64xf32>
    %30 = vector.broadcast %29 : vector<1x64xf32> to vector<16x64xf32>
    %31 = arith.mulf %26, %30 : vector<16x64xf32>
    %32 = arith.addf %25, %31 : vector<16x64xf32>
    %c1_22 = arith.constant 1 : index
    %c0_23 = arith.constant 0 : index
    %33 = vector.load %arg5[%c1_22, %c0_23] : memref<18x72xf32, #tpu.memory_space<vmem>>, vector<16x64xf32>
    %c3 = arith.constant 3 : index
    %c0_24 = arith.constant 0 : index
    %34 = vector.load %arg2[%c3, %c0_24] : memref<9x64xf32, #tpu.memory_space<vmem>>, vector<1x64xf32>
    %35 = vector.shape_cast %34 : vector<1x64xf32> to vector<64xf32>
    %36 = vector.shape_cast %35 : vector<64xf32> to vector<1x64xf32>
    %37 = vector.broadcast %36 : vector<1x64xf32> to vector<16x64xf32>
    %38 = arith.mulf %33, %37 : vector<16x64xf32>
    %39 = arith.addf %32, %38 : vector<16x64xf32>
    %c1_25 = arith.constant 1 : index
    %c4_26 = arith.constant 4 : index
    %40 = vector.load %arg5[%c1_25, %c4_26] : memref<18x72xf32, #tpu.memory_space<vmem>>, vector<16x64xf32>
    %c4_27 = arith.constant 4 : index
    %c0_28 = arith.constant 0 : index
    %41 = vector.load %arg2[%c4_27, %c0_28] : memref<9x64xf32, #tpu.memory_space<vmem>>, vector<1x64xf32>
    %42 = vector.shape_cast %41 : vector<1x64xf32> to vector<64xf32>
    %43 = vector.shape_cast %42 : vector<64xf32> to vector<1x64xf32>
    %44 = vector.broadcast %43 : vector<1x64xf32> to vector<16x64xf32>
    %45 = arith.mulf %40, %44 : vector<16x64xf32>
    %46 = arith.addf %39, %45 : vector<16x64xf32>
    %c1_29 = arith.constant 1 : index
    %c8_30 = arith.constant 8 : index
    %47 = vector.load %arg5[%c1_29, %c8_30] : memref<18x72xf32, #tpu.memory_space<vmem>>, vector<16x64xf32>
    %c5 = arith.constant 5 : index
    %c0_31 = arith.constant 0 : index
    %48 = vector.load %arg2[%c5, %c0_31] : memref<9x64xf32, #tpu.memory_space<vmem>>, vector<1x64xf32>
    %49 = vector.shape_cast %48 : vector<1x64xf32> to vector<64xf32>
    %50 = vector.shape_cast %49 : vector<64xf32> to vector<1x64xf32>
    %51 = vector.broadcast %50 : vector<1x64xf32> to vector<16x64xf32>
    %52 = arith.mulf %47, %51 : vector<16x64xf32>
    %53 = arith.addf %46, %52 : vector<16x64xf32>
    %c2_32 = arith.constant 2 : index
    %c0_33 = arith.constant 0 : index
    %54 = vector.load %arg5[%c2_32, %c0_33] : memref<18x72xf32, #tpu.memory_space<vmem>>, vector<16x64xf32>
    %c6 = arith.constant 6 : index
    %c0_34 = arith.constant 0 : index
    %55 = vector.load %arg2[%c6, %c0_34] : memref<9x64xf32, #tpu.memory_space<vmem>>, vector<1x64xf32>
    %56 = vector.shape_cast %55 : vector<1x64xf32> to vector<64xf32>
    %57 = vector.shape_cast %56 : vector<64xf32> to vector<1x64xf32>
    %58 = vector.broadcast %57 : vector<1x64xf32> to vector<16x64xf32>
    %59 = arith.mulf %54, %58 : vector<16x64xf32>
    %60 = arith.addf %53, %59 : vector<16x64xf32>
    %c2_35 = arith.constant 2 : index
    %c4_36 = arith.constant 4 : index
    %61 = vector.load %arg5[%c2_35, %c4_36] : memref<18x72xf32, #tpu.memory_space<vmem>>, vector<16x64xf32>
    %c7 = arith.constant 7 : index
    %c0_37 = arith.constant 0 : index
    %62 = vector.load %arg2[%c7, %c0_37] : memref<9x64xf32, #tpu.memory_space<vmem>>, vector<1x64xf32>
    %63 = vector.shape_cast %62 : vector<1x64xf32> to vector<64xf32>
    %64 = vector.shape_cast %63 : vector<64xf32> to vector<1x64xf32>
    %65 = vector.broadcast %64 : vector<1x64xf32> to vector<16x64xf32>
    %66 = arith.mulf %61, %65 : vector<16x64xf32>
    %67 = arith.addf %60, %66 : vector<16x64xf32>
    %c2_38 = arith.constant 2 : index
    %c8_39 = arith.constant 8 : index
    %68 = vector.load %arg5[%c2_38, %c8_39] : memref<18x72xf32, #tpu.memory_space<vmem>>, vector<16x64xf32>
    %c8_40 = arith.constant 8 : index
    %c0_41 = arith.constant 0 : index
    %69 = vector.load %arg2[%c8_40, %c0_41] : memref<9x64xf32, #tpu.memory_space<vmem>>, vector<1x64xf32>
    %70 = vector.shape_cast %69 : vector<1x64xf32> to vector<64xf32>
    %71 = vector.shape_cast %70 : vector<64xf32> to vector<1x64xf32>
    %72 = vector.broadcast %71 : vector<1x64xf32> to vector<16x64xf32>
    %73 = arith.mulf %68, %72 : vector<16x64xf32>
    %74 = arith.addf %67, %73 : vector<16x64xf32>
    %c0_42 = arith.constant 0 : index
    %c0_43 = arith.constant 0 : index
    %c0_44 = arith.constant 0 : index
    %75 = vector.load %arg1[%c0_42, %c0_43, %c0_44] : memref<1x16x64xf32, #tpu.memory_space<vmem>>, vector<1x16x64xf32>
    %76 = vector.shape_cast %75 : vector<1x16x64xf32> to vector<16x64xf32>
    %77 = arith.addf %76, %74 : vector<16x64xf32>
    %c0_45 = arith.constant 0 : index
    %c0_46 = arith.constant 0 : index
    %78 = vector.load %arg3[%c0_45, %c0_46] : memref<1x64xf32, #tpu.memory_space<vmem>>, vector<1x64xf32>
    %79 = vector.shape_cast %78 : vector<1x64xf32> to vector<64xf32>
    %80 = vector.shape_cast %79 : vector<64xf32> to vector<1x64xf32>
    %81 = vector.broadcast %80 : vector<1x64xf32> to vector<16x64xf32>
    %82 = arith.addf %77, %81 : vector<16x64xf32>
    %c0_47 = arith.constant 0 : index
    %c0_48 = arith.constant 0 : index
    %c0_49 = arith.constant 0 : index
    %83 = vector.load %arg4[%c0_47, %c0_48, %c0_49] : memref<1x16x64xf32, #tpu.memory_space<vmem>>, vector<1x16x64xf32>
    %84 = vector.shape_cast %83 : vector<1x16x64xf32> to vector<16x64xf32>
    %85 = vector.shape_cast %82 : vector<16x64xf32> to vector<1x16x64xf32>
    tpu.vector_store %arg4[%c0_47, %c0_48, %c0_49], %85 {strides = array<i32>} : memref<1x16x64xf32, #tpu.memory_space<vmem>>, vector<1x16x64xf32>,
    return
  }
  func.func @transform_0(%arg0: i32) -> (i32, i32, i32) {
    %c0_i32 = arith.constant 0 : i32
    %c0_i32_0 = arith.constant 0 : i32
    %c0_i32_1 = arith.constant 0 : i32
    return %arg0, %c0_i32, %c0_i32_0 : i32, i32, i32
  }
  func.func @transform_1(%arg0: i32) -> (i32, i32) {
    %c0_i32 = arith.constant 0 : i32
    %c0_i32_0 = arith.constant 0 : i32
    %c0_i32_1 = arith.constant 0 : i32
    return %c0_i32, %c0_i32_0 : i32, i32
  }
  func.func @transform_2(%arg0: i32) -> (i32, i32) {
    %c0_i32 = arith.constant 0 : i32
    %c0_i32_0 = arith.constant 0 : i32
    %c0_i32_1 = arith.constant 0 : i32
    return %c0_i32, %c0_i32_0 : i32, i32
  }
  func.func @transform_3(%arg0: i32) -> (i32, i32, i32) {
    %c0_i32 = arith.constant 0 : i32
    %c0_i32_0 = arith.constant 0 : i32
    %c0_i32_1 = arith.constant 0 : i32
    return %arg0, %c0_i32, %c0_i32_0 : i32, i32, i32
  }
}

</mosaic_0001>

<llo_original>
// kernel: tpu_custom_call.1
$region0: #{tpu_custom_call.1}
  #allocation0 [shape = 'u32[]', space=smem, size = 0x4, offset = 0x4, fixed_abs, tag = 'smem constant byte address 0x4 - core index']
  #allocation1 [shape = 'u32[72,128]{1,0:T(1,128)}', space=vmem, size = 0x9000, scoped, tag = 'internal scratch']
  #allocation2 [shape = 'f32[18,72]{1,0:T(8,128)}', space=vmem, size = 0x3000, scoped, tag = 'scratch operand']
  %s0 = inlined_call_operand.hbm [shape: f32[2,16,64], index: 0, kind: input, shape index: {}]
  %s1 = inlined_call_operand.hbm [shape: f32[9,64], index: 1, kind: input, shape index: {}]
  %s2 = inlined_call_operand.vmem [shape: f32[1,64], index: 2, kind: input, shape index: {}]
  %s3 = inlined_call_operand.hbm [shape: f32[2,16,64], index: 3, kind: output, shape index: {}]
  %s4 = sld [smem:[#allocation0]]
  $region53: #{tpu_custom_call.1} parent=0
    _
  %s6 = ssub.s32 1, %s4
  %s7 = scalar_select 0, %s6, %s4
  $region1: #{tpu_custom_call.1} parent=0
    #allocation3 [shape = 'u8[16384]{0}', space=vmem, size = 0x4000, scoped, tag = 'input window, operand 0']
    #allocation4 [shape = 's32[2]{0}', space=sflag, size = 0x8, scoped, tag = 'scoped memory for tpu_custom_call.1']
    #allocation5 [shape = 's32[2]{0}', space=sflag, size = 0x8, scoped, tag = 'scoped memory for tpu_custom_call.1']
    #allocation6 [shape = 'u8[8192]{0}', space=vmem, size = 0x2000, scoped, tag = 'input window, operand 1, single buffered']
    #allocation7 [shape = 's32[1]{0}', space=sflag, size = 0x4, scoped, tag = 'scoped memory for tpu_custom_call.1']
    #allocation8 [shape = 'u8[16384]{0}', space=vmem, size = 0x4000, scoped, tag = 'output window, operand 0']
    %8 = vsyncpa [#allocation4], 0
    %s9 = scalar_lea.sflag [#allocation4], 1
    %10 = vsyncpa %s9, 0
    %11 = vsyncpa [#allocation7], 0
    %12 = vsyncpa [#allocation5], 0
    %s13 = scalar_lea.sflag [#allocation5], 1
    %14 = vsyncpa %s13, 0
    loop: start=0, step=1, limit=4
    $region2: #{tpu_custom_call.1} parent=1 // loop_pre_header
      _
    $region3: #{tpu_custom_call.1} parent=1 // loop_header
      %s16 = sphi 0, %s20
      %p17 = scmp.ge.s32.totalorder %s16, 4
      %s26 = sphi 0, %s28
      %s29 = sphi 0, %s26
      %s30 = sphi 0, %s29
      %s46 = sphi 0, %s30
      %s50 = sphi 0, %s50
      %s52 = sphi 0, %s50
      %s53 = sphi 0, %s52
      %s67 = sphi 0, %s53
      %s71 = sphi 0, %s71
      %s73 = sphi 0, %s71
      %s74 = sphi 0, %s73
      %s88 = sphi 0, %s74
      %s94 = sphi 0, %s96
      %s97 = sphi 0, %s94
      %s98 = sphi 0, %s97
      %s114 = sphi 0, %s98
    $region4: #{tpu_custom_call.1} parent=1 // loop_header_branch
      %19 = sbr.rel (%p17) target = $region8
    $region5: #{tpu_custom_call.1} parent=1 // loop_body
      %s21 = ssub.s32 %s16, 1
      %s22 = ssub.s32 %s16, 2
      %s23 = sadd.s32 %s16, 1
      %s24 = ssub.s32 %s16, %s23
      %p25 = scmp.eq.s32.totalorder %s24, 0
      %s27 = sadd.s32 %s26, 1
      %s28 = scalar_select %p25, %s26, %s27
      %p31 = pneg %p25
      %p32 = scmp.eq.s32.totalorder %s16, 1
      %p33 = por %p31, %p32
      %p34 = scmp.ne.s32.totalorder %s26, %s29
      %p35 = scmp.eq.s32.totalorder %s16, 0
      %p36 = por %p34, %p35
      %p37 = scmp.ne.s32.totalorder %s26, %s29
      %p38 = scmp.eq.s32.totalorder %s21, 1
      %p39 = por %p37, %p38
      %p40 = scmp.ne.s32.totalorder %s29, %s30
      %p41 = scmp.eq.s32.totalorder %s21, 0
      %p42 = por %p40, %p41
      %p43 = scmp.ne.s32.totalorder %s29, %s30
      %p44 = scmp.eq.s32.totalorder %s22, 1
      %p45 = por %p43, %p44
      %p47 = scmp.ne.s32.totalorder %s30, %s46
      %p48 = scmp.eq.s32.totalorder %s22, 0
      %p49 = por %p47, %p48
      %s51 = sadd.s32 %s50, 1
      %p54 = scmp.eq.s32.totalorder %s16, 1
      %p55 = scmp.ne.s32.totalorder %s50, %s52
      %p56 = scmp.eq.s32.totalorder %s16, 0
      %p57 = por %p55, %p56
      %p58 = scmp.ne.s32.totalorder %s50, %s52
      %p59 = scmp.eq.s32.totalorder %s21, 1
      %p60 = por %p58, %p59
      %p61 = scmp.ne.s32.totalorder %s52, %s53
      %p62 = scmp.eq.s32.totalorder %s21, 0
      %p63 = por %p61, %p62
      %p64 = scmp.ne.s32.totalorder %s52, %s53
      %p65 = scmp.eq.s32.totalorder %s22, 1
      %p66 = por %p64, %p65
      %p68 = scmp.ne.s32.totalorder %s53, %s67
      %p69 = scmp.eq.s32.totalorder %s22, 0
      %p70 = por %p68, %p69
      %s72 = sadd.s32 %s71, 1
      %p75 = scmp.eq.s32.totalorder %s16, 1
      %p76 = scmp.ne.s32.totalorder %s71, %s73
      %p77 = scmp.eq.s32.totalorder %s16, 0
      %p78 = por %p76, %p77
      %p79 = scmp.ne.s32.totalorder %s71, %s73
      %p80 = scmp.eq.s32.totalorder %s21, 1
      %p81 = por %p79, %p80
      %p82 = scmp.ne.s32.totalorder %s73, %s74
      %p83 = scmp.eq.s32.totalorder %s21, 0
      %p84 = por %p82, %p83
      %p85 = scmp.ne.s32.totalorder %s73, %s74
      %p86 = scmp.eq.s32.totalorder %s22, 1
      %p87 = por %p85, %p86
      %p89 = scmp.ne.s32.totalorder %s74, %s88
      %p90 = scmp.eq.s32.totalorder %s22, 0
      %p91 = por %p89, %p90
      %s92 = ssub.s32 %s16, %s23
      %p93 = scmp.eq.s32.totalorder %s92, 0
      %s95 = sadd.s32 %s94, 1
      %s96 = scalar_select %p93, %s94, %s95
      %p99 = pneg %p93
      %p100 = scmp.eq.s32.totalorder %s16, 1
      %p101 = por %p99, %p100
      %p102 = scmp.ne.s32.totalorder %s94, %s97
      %p103 = scmp.eq.s32.totalorder %s16, 0
      %p104 = por %p102, %p103
      %p105 = scmp.ne.s32.totalorder %s94, %s97
      %p106 = scmp.eq.s32.totalorder %s21, 1
      %p107 = por %p105, %p106
      %p108 = scmp.ne.s32.totalorder %s97, %s98
      %p109 = scmp.eq.s32.totalorder %s21, 0
      %p110 = por %p108, %p109
      %p111 = scmp.ne.s32.totalorder %s97, %s98
      %p112 = scmp.eq.s32.totalorder %s22, 1
      %p113 = por %p111, %p112
      %p115 = scmp.ne.s32.totalorder %s98, %s114
      %p116 = scmp.eq.s32.totalorder %s22, 0
      %p117 = por %p115, %p116
      %p118 = scmp.le.s32.totalorder 1, %s16
      %p119 = scmp.lt.s32.totalorder %s16, 3
      %p120 = pnand %p118, %p119
      %p121 = pneg %p120
      // Predicated region
      $region9: #{tpu_custom_call.1} parent=5 // pred_check
        _
      $region10: #{tpu_custom_call.1} parent=5 // pred_check_branch
        %123 = sbr.rel (%p120) target = $region12
      $region11: #{tpu_custom_call.1} parent=5 // pred_region
        %s124 = ssub.s32 %s16, 1
        // Predicated region
        $region13: #{tpu_custom_call.1} parent=11 // pred_check
          %p125 = pneg %p63
        $region14: #{tpu_custom_call.1} parent=11 // pred_check_branch
          %127 = sbr.rel (%p125) target = $region16
        $region15: #{tpu_custom_call.1} parent=11 // pred_region
          %129 = vsyncadd [#allocation7], 0
          %s130 = sshll.u32 %s1, 4
          %s131 = int_to_ptr.hbm [resolvable:$true] %s130
          %s132 = sshll.u32 [#allocation6], 4
          %s133 = int_to_ptr.vmem [resolvable:$true] %s132
          %138 = dma.hbm_to_vmem [thread:$0]  %s131, 256, %s133, [#allocation7], 128, 128, 8
        $region16: #{tpu_custom_call.1} parent=11 // pred_fallthru
          _
        // Predicated region
        $region17: #{tpu_custom_call.1} parent=11 // pred_check
          %p139 = pneg %p84
        $region18: #{tpu_custom_call.1} parent=11 // pred_check_branch
          %141 = sbr.rel (%p139) target = $region20
        $region19: #{tpu_custom_call.1} parent=11 // pred_region
          _
        $region20: #{tpu_custom_call.1} parent=11 // pred_fallthru
          _
      $region12: #{tpu_custom_call.1} parent=5 // pred_fallthru
        _
      %p142 = scmp.lt.s32.totalorder %s16, 2
      // Predicated region
      $region21: #{tpu_custom_call.1} parent=5 // pred_check
        %p143 = pneg %p142
      $region22: #{tpu_custom_call.1} parent=5 // pred_check_branch
        %145 = sbr.rel (%p143) target = $region24
      $region23: #{tpu_custom_call.1} parent=5 // pred_region
        // Predicated region
        $region25: #{tpu_custom_call.1} parent=23 // pred_check
          %p146 = pneg %p36
        $region26: #{tpu_custom_call.1} parent=23 // pred_check_branch
          %148 = sbr.rel (%p146) target = $region28
        $region27: #{tpu_custom_call.1} parent=23 // pred_region
          %s149 = sand.u32 %s26, 1
          %s150 = scalar_lea.sflag [#allocation4], %s149
          %s151 = sand.u32 %s26, 1
          %s152 = smul.addr %s151, 16
          %s153 = scalar_lea.vmem [#allocation3], %s152
          %155 = vsyncadd %s150, 0
          %s156 = smul.addr %s16, 2
          %s157 = smul.addr %s156, 8
          %s158 = scalar_lea.hbm %s0, %s157
          %s159 = sshll.u32 %s158, 4
          %s160 = int_to_ptr.hbm [resolvable:$true] %s159
          %s161 = sshll.u32 %s153, 4
          %s162 = int_to_ptr.vmem [resolvable:$true] %s161
          %167 = dma.hbm_to_vmem [thread:$0]  %s160, 256, %s162, %s150, 128, 128, 8
        $region28: #{tpu_custom_call.1} parent=23 // pred_fallthru
          _
      $region24: #{tpu_custom_call.1} parent=5 // pred_fallthru
        _
      %p168 = scmp.le.s32.totalorder 1, %s16
      %p169 = scmp.lt.s32.totalorder %s16, 3
      %p170 = pnand %p168, %p169
      %p171 = pneg %p170
      // Predicated region
      $region29: #{tpu_custom_call.1} parent=5 // pred_check
        _
      $region30: #{tpu_custom_call.1} parent=5 // pred_check_branch
        %173 = sbr.rel (%p170) target = $region32
      $region31: #{tpu_custom_call.1} parent=5 // pred_region
        %s174 = ssub.s32 %s16, 1
        %s175 = sand.u32 %s29, 1
        %s176 = scalar_lea.sflag [#allocation4], %s175
        %s177 = sand.u32 %s29, 1
        %s178 = smul.addr %s177, 16
        %s179 = scalar_lea.vmem [#allocation3], %s178
        // Predicated region
        $region33: #{tpu_custom_call.1} parent=31 // pred_check
          %p180 = pneg %p42
        $region34: #{tpu_custom_call.1} parent=31 // pred_check_branch
          %182 = sbr.rel (%p180) target = $region36
        $region35: #{tpu_custom_call.1} parent=31 // pred_region
          %184 = dma.done %s176, 256
        $region36: #{tpu_custom_call.1} parent=31 // pred_fallthru
          _
        // Predicated region
        $region37: #{tpu_custom_call.1} parent=31 // pred_check
          %p185 = pneg %p63
        $region38: #{tpu_custom_call.1} parent=31 // pred_check_branch
          %187 = sbr.rel (%p185) target = $region40
        $region39: #{tpu_custom_call.1} parent=31 // pred_region
          %189 = dma.done [#allocation7], 256
        $region40: #{tpu_custom_call.1} parent=31 // pred_fallthru
          _
        %s190 = sand.u32 %s29, 1
        %s191 = scalar_lea.sflag [#allocation4], %s190
        %s192 = sand.u32 %s29, 1
        %s193 = smul.addr %s192, 16
        %s194 = scalar_lea.vmem [#allocation3], %s193
        %p195 = pneg %p42
        %p196 = pneg %p39
        %p197 = pneg %p63
        %p198 = pneg %p60
        %p199 = pneg %p84
        %p200 = pneg %p81
        %p201 = pneg %p110
        %p202 = pneg %p107
        %s203 = sand.u32 %s97, 1
        %s204 = scalar_lea.sflag [#allocation5], %s203
        %s205 = sand.u32 %s97, 1
        %s206 = smul.addr %s205, 16
        %s207 = scalar_lea.vmem [#allocation8], %s206
        %vm208 = vcmask 581632
        %209 = vst.msk [vmem:[#allocation2] sm:$0x1] %vm208, 0.0
        %210 = vst.msk [vmem:[#allocation2 + $0x11] sm:$0x1] %vm208, 0.0
        %vm211 = vcmask 31744
        %212 = vst.msk [vmem:[#allocation2] sm:$0xff] %vm211, 0.0
        %213 = vst.msk [vmem:[#allocation2 + $0x8] sm:$0xff] %vm211, 0.0
        %vm214 = vcmask 25600
        %215 = vst.msk [vmem:[#allocation2 + $0x10] sm:$0x3] %vm214, 0.0
        %vm216 = vcmask 589344
        %217 = vst.msk [vmem:[#allocation2] sm:$0xff] %vm216, 0.0
        %218 = vst.msk [vmem:[#allocation2 + $0x8] sm:$0xff] %vm216, 0.0
        %vm219 = vcmask 583200
        %220 = vst.msk [vmem:[#allocation2 + $0x10] sm:$0x3] %vm219, 0.0
        %v221 = vld [vmem:[%s179] sm:$0xff]
        %v222 = vld [vmem:[%s179 + $0x8] sm:$0xff]
        %225 = vrot.lane.b32.xlu0 %v221, 4
        %v226 = vpop.permute.xlu0 %225
        %227 = vrot.lane.b32.xlu0 %v222, 4
        %v228 = vpop.permute.xlu0 %227
        %vm231 = vcmask 556064
        %232 = vst.msk [vmem:[#allocation2 + $0x1] sm:$0xff] %vm231, %v226
        %233 = vst.msk [vmem:[#allocation2 + $0x9] sm:$0xff] %vm231, %v228
        %v234 = vld [vmem:[#allocation2] sm:$0xff]
        %v235 = vld [vmem:[#allocation2 + $0x8] sm:$0xff]
        %v236 = vld [vmem:[#allocation6] sm:$0x1]
        %v237 = vperm.slane %v236, 0
        %v238 = vmul.f32 %v234, %v237
        %v239 = vmul.f32 %v235, %v237
        %v240 = vadd.f32 %v238, 0.0
        %v241 = vadd.f32 %v239, 0.0
        %v242 = vld [vmem:[#allocation6 + $0x1] sm:$0x1]
        %v243 = vperm.slane %v242, 0
        %245 = vrot.lane.b32.xlu0 %v243, 4
        %v246 = vpop.permute.xlu0 %245
        %v248 = vmul.f32 %v234, %v246
        %v249 = vmul.f32 %v235, %v246
        %252 = vrot.lane.b32.xlu0 %v248, 124
        %v253 = vpop.permute.xlu0 %252
        %254 = vrot.lane.b32.xlu0 %v249, 124
        %v255 = vpop.permute.xlu0 %254
        %v258 = vadd.f32 %v240, %v253
        %v259 = vadd.f32 %v241, %v255
        %v260 = vld [vmem:[#allocation6 + $0x2] sm:$0x1]
        %v261 = vperm.slane %v260, 0
        %263 = vrot.lane.b32.xlu0 %v261, 8
        %v264 = vpop.permute.xlu0 %263
        %v266 = vmul.f32 %v234, %v264
        %v267 = vmul.f32 %v235, %v264
        %270 = vrot.lane.b32.xlu0 %v266, 120
        %v271 = vpop.permute.xlu0 %270
        %272 = vrot.lane.b32.xlu0 %v267, 120
        %v273 = vpop.permute.xlu0 %272
        %v276 = vadd.f32 %v258, %v271
        %v277 = vadd.f32 %v259, %v273
        %v278 = vld [vmem:[#allocation2 + $0x1] sm:$0xff]
        %v279 = vld [vmem:[#allocation2 + $0x9] sm:$0xff]
        %v280 = vld [vmem:[#allocation6 + $0x3] sm:$0x1]
        %v281 = vperm.slane %v280, 0
        %v282 = vmul.f32 %v278, %v281
        %v283 = vmul.f32 %v279, %v281
        %v284 = vadd.f32 %v276, %v282
        %v285 = vadd.f32 %v277, %v283
        %v286 = vld [vmem:[#allocation6 + $0x4] sm:$0x1]
        %v287 = vperm.slane %v286, 0
        %289 = vrot.lane.b32.xlu0 %v287, 4
        %v290 = vpop.permute.xlu0 %289
        %v292 = vmul.f32 %v278, %v290
        %v293 = vmul.f32 %v279, %v290
        %296 = vrot.lane.b32.xlu0 %v292, 124
        %v297 = vpop.permute.xlu0 %296
        %298 = vrot.lane.b32.xlu0 %v293, 124
        %v299 = vpop.permute.xlu0 %298
        %v302 = vadd.f32 %v284, %v297
        %v303 = vadd.f32 %v285, %v299
        %v304 = vld [vmem:[#allocation6 + $0x5] sm:$0x1]
        %v305 = vperm.slane %v304, 0
        %307 = vrot.lane.b32.xlu0 %v305, 8
        %v308 = vpop.permute.xlu0 %307
        %v310 = vmul.f32 %v278, %v308
        %v311 = vmul.f32 %v279, %v308
        %314 = vrot.lane.b32.xlu0 %v310, 120
        %v315 = vpop.permute.xlu0 %314
        %316 = vrot.lane.b32.xlu0 %v311, 120
        %v317 = vpop.permute.xlu0 %316
        %v320 = vadd.f32 %v302, %v315
        %v321 = vadd.f32 %v303, %v317
        %v322 = vld [vmem:[#allocation2 + $0x2] sm:$0xff]
        %v323 = vld [vmem:[#allocation2 + $0xa] sm:$0xff]
        %v324 = vld [vmem:[#allocation6 + $0x6] sm:$0x1]
        %v325 = vperm.slane %v324, 0
        %v326 = vmul.f32 %v322, %v325
        %v327 = vmul.f32 %v323, %v325
        %v328 = vadd.f32 %v320, %v326
        %v329 = vadd.f32 %v321, %v327
        %v330 = vld [vmem:[#allocation6 + $0x7] sm:$0x1]
        %v331 = vperm.slane %v330, 0
        %333 = vrot.lane.b32.xlu0 %v331, 4
        %v334 = vpop.permute.xlu0 %333
        %v336 = vmul.f32 %v322, %v334
        %v337 = vmul.f32 %v323, %v334
        %340 = vrot.lane.b32.xlu0 %v336, 124
        %v341 = vpop.permute.xlu0 %340
        %342 = vrot.lane.b32.xlu0 %v337, 124
        %v343 = vpop.permute.xlu0 %342
        %v346 = vadd.f32 %v328, %v341
        %v347 = vadd.f32 %v329, %v343
        %v348 = vld [vmem:[#allocation6 + $0x8] sm:$0x1]
        %v349 = vperm.slane %v348, 0
        %351 = vrot.lane.b32.xlu0 %v349, 8
        %v352 = vpop.permute.xlu0 %351
        %v354 = vmul.f32 %v322, %v352
        %v355 = vmul.f32 %v323, %v352
        %358 = vrot.lane.b32.xlu0 %v354, 120
        %v359 = vpop.permute.xlu0 %358
        %360 = vrot.lane.b32.xlu0 %v355, 120
        %v361 = vpop.permute.xlu0 %360
        %v364 = vadd.f32 %v346, %v359
        %v365 = vadd.f32 %v347, %v361
        %v366 = vld [vmem:[%s179] sm:$0xff]
        %v367 = vld [vmem:[%s179 + $0x8] sm:$0xff]
        %v368 = vadd.f32 %v366, %v364
        %v369 = vadd.f32 %v367, %v365
        %v370 = vld [vmem:[%s2] sm:$0x1]
        %v372 = vperm.slane %v370, 0
        %v374 = vadd.f32 %v368, %v372
        %v375 = vadd.f32 %v369, %v372
        %vm376 = vcmask 523264
        %377 = vst.msk [vmem:[%s207] sm:$0xff] %vm376, %v374
        %378 = vst.msk [vmem:[%s207 + $0x8] sm:$0xff] %vm376, %v375
        %s379 = sand.u32 %s97, 1
        %s380 = scalar_lea.sflag [#allocation5], %s379
        %s381 = sand.u32 %s97, 1
        %s382 = smul.addr %s381, 16
        %s383 = scalar_lea.vmem [#allocation8], %s382
        // Predicated region
        $region41: #{tpu_custom_call.1} parent=31 // pred_check
          %p384 = pneg %p107
        $region42: #{tpu_custom_call.1} parent=31 // pred_check_branch
          %386 = sbr.rel (%p384) target = $region44
        $region43: #{tpu_custom_call.1} parent=31 // pred_region
          %388 = vsyncadd %s380, 0
          %s389 = smul.addr %s21, 2
          %s390 = smul.addr %s389, 8
          %s391 = scalar_lea.hbm %s3, %s390
          %s392 = sshll.u32 %s383, 4
          %s393 = int_to_ptr.vmem [resolvable:$true] %s392
          %s394 = sshll.u32 %s391, 4
          %s395 = int_to_ptr.hbm [resolvable:$true] %s394
          %400 = dma.vmem_to_hbm [thread:$0]  %s393, 256, %s395, %s380, 128, 128, 8
        $region44: #{tpu_custom_call.1} parent=31 // pred_fallthru
          _
      $region32: #{tpu_custom_call.1} parent=5 // pred_fallthru
        _
      %p401 = scmp.le.s32.totalorder 2, %s16
      // Predicated region
      $region45: #{tpu_custom_call.1} parent=5 // pred_check
        %p402 = pneg %p401
      $region46: #{tpu_custom_call.1} parent=5 // pred_check_branch
        %404 = sbr.rel (%p402) target = $region48
      $region47: #{tpu_custom_call.1} parent=5 // pred_region
        %s405 = ssub.s32 %s16, 2
        // Predicated region
        $region49: #{tpu_custom_call.1} parent=47 // pred_check
          %p406 = pneg %p113
        $region50: #{tpu_custom_call.1} parent=47 // pred_check_branch
          %408 = sbr.rel (%p406) target = $region52
        $region51: #{tpu_custom_call.1} parent=47 // pred_region
          %s409 = sand.u32 %s98, 1
          %s410 = scalar_lea.sflag [#allocation5], %s409
          %s411 = sand.u32 %s98, 1
          %s412 = smul.addr %s411, 16
          %s413 = scalar_lea.vmem [#allocation8], %s412
          %415 = dma.done %s410, 256
        $region52: #{tpu_custom_call.1} parent=47 // pred_fallthru
          _
      $region48: #{tpu_custom_call.1} parent=5 // pred_fallthru
        _
    $region6: #{tpu_custom_call.1} parent=1 // loop_footer
      %s20 = sadd.s32 1, %s16
    $region7: #{tpu_custom_call.1} parent=1 // loop_footer_branch
      %15 = sbr.rel target = $region3
    $region8: #{tpu_custom_call.1} parent=1 // loop_exit
      _
    %416 = vsyncpa [#allocation4], 1
    %s417 = scalar_lea.sflag [#allocation4], 1
    %418 = vsyncpa %s417, 1
    %419 = vsyncpa [#allocation7], 1
    %420 = vsyncpa [#allocation5], 1
    %s421 = scalar_lea.sflag [#allocation5], 1
    %422 = vsyncpa %s421, 1

</llo_original>
